<compile_context>
chip_gen: v7x
topology: tpu7x:2x2x1
jax: 0.10.0
libtpu: 0.0.40
codegen_flags: <defaults>
</compile_context>

<pallas_src>
import functools

import jax
import jax.numpy as jnp
from jax import lax
from jax.experimental import pallas as pl
from jax.experimental.pallas import tpu as pltpu


def _round_up(x, m):
    return ((x + m - 1) // m) * m


def _sim_min_loss_kernel(a_ref, b_ref, a_inv_ref, b_inv_ref, part_ref, acc_ref, *,
                         n_rows_a, n_rows_b, tile_m, tile_n,
                         row_ragged, col_ragged):
    i = pl.program_id(0)
    j = pl.program_id(1)
    last_i = pl.num_programs(0) - 1
    last_j = pl.num_programs(1) - 1

    @pl.when(j == 0)
    def _():
        acc_ref[...] = jnp.zeros_like(acc_ref)

    # MXU matmul on the raw (native-dtype) tiles, contracting the feature
    # (lane) dim of both operands directly ("NT" form) -- no in-kernel transpose.
    sim = lax.dot_general(
        a_ref[...], b_ref[...],
        dimension_numbers=(((1,), (1,)), ((), ())),
        preferred_element_type=jnp.float32)                          # [tm, tn]

    # cosine sim = raw dot * (1/||a_row||) * (1/||b_row||); inverse norms are
    # precomputed outside the kernel (no per-step recompute, megacore-safe).
    sim = (sim * a_inv_ref[...]) * b_inv_ref[...]
    sim = jnp.clip(sim, 0.0005, 0.9995)
    loss = -jnp.log(1.0 - sim)

    if row_ragged or col_ragged:
        # Only edge tiles pay the masking cost; interior tiles skip it.
        if row_ragged and col_ragged:
            edge = (i == last_i) | (j == last_j)
        elif row_ragged:
            edge = i == last_i
        else:
            edge = j == last_j

        @pl.when(edge)
        def _():
            rowm = ((i * tile_m +
                     lax.broadcasted_iota(jnp.int32, (tile_m, 1), 0))
                    < n_rows_a).astype(jnp.float32)                  # (tm, 1)
            colm = ((j * tile_n +
                     lax.broadcasted_iota(jnp.int32, (1, tile_n), 1))
                    < n_rows_b).astype(jnp.float32)                  # (1, tn)
            acc_ref[...] += jnp.sum(loss * rowm * colm, axis=0, keepdims=True)

        @pl.when(jnp.logical_not(edge))
        def _():
            acc_ref[...] += jnp.sum(loss, axis=0, keepdims=True)
    else:
        acc_ref[...] += jnp.sum(loss, axis=0, keepdims=True)

    # Per-row-tile partial sum: the single cross-lane reduce happens once per i.
    @pl.when(j == last_j)
    def _():
        part_ref[0, 0] = jnp.sum(acc_ref[...])


def _pick_tiles(n_a, n_b, d_pad, itemsize, tile_m=None, tile_n=None):
    """Derive (tm, tn, n_pad, m_pad) from shapes/dtype under a VMEM budget."""
    block_budget = 12 << 20   # double-buffered operand blocks (A + B)
    tmp_budget = 6 << 20      # [tm, tn] f32 in-kernel temporaries (~3 live)

    def blk(rows):            # conservatively count 2 pipeline buffers
        return 2 * rows * d_pad * itemsize

    # Inner (B) tile: keep B fully resident when it fits in half the budget
    # (constant block index -> fetched from HBM only once).
    m_full = _round_up(n_b, 8)
    if tile_n is not None:
        tn = m_full if tile_n >= m_full else max(128, _round_up(tile_n, 128))
    elif blk(m_full) <= block_budget // 2:
        tn = m_full
    else:
        tn = 128
        while blk(tn * 2) <= block_budget // 2 and tn * 2 <= _round_up(n_b, 128):
            tn *= 2
    m_pad = _round_up(n_b, tn)

    # Outer (A) tile: use the remaining budget, bounded by temp-array size.
    tm_cap = _round_up(n_a, 8)
    tn_lanes = _round_up(tn, 128)
    if tile_m is not None:
        tm = min(_round_up(tile_m, 8), tm_cap)
    else:
        budget_left = max(block_budget - blk(tn), blk(8))
        tm = 8
        while (tm * 2 <= min(tm_cap, 1024)
               and blk(tm * 2) <= budget_left
               and 3 * (tm * 2) * tn_lanes * 4 <= tmp_budget):
            tm *= 2
        if (tm < tm_cap <= 1024 and blk(tm_cap) <= budget_left
                and 3 * tm_cap * tn_lanes * 4 <= tmp_budget):
            tm = tm_cap
    n_pad = _round_up(n_a, tm)
    return tm, tn, n_pad, m_pad


def sim_min_loss(cls_score, label, *, loss_weight=1.0, use_bf16_matmul=False,
                 tile_m=None, tile_n=None):
    """Pallas implementation of SimMinLoss.forward (metric='cos', reduction='mean').

    use_bf16_matmul=False keeps PyTorch-matching f32 matmul numerics; set True
    to trade a little accuracy for ~3-4x MXU throughput and half the DMA bytes.
    """
    n, d = cls_score.shape
    m, d2 = label.shape
    assert d == d2, "feature dims of cls_score and label must match"

    # The pairwise-sum loss is symmetric, so orient the problem with the
    # larger-row operand as the outer (row-tiled) matrix A and the smaller one
    # as the inner matrix B (most likely to stay VMEM-resident).
    if m > n:
        a_mat, b_mat, n_a, n_b = label, cls_score, m, n
    else:
        a_mat, b_mat, n_a, n_b = cls_score, label, n, m

    mat_dtype = jnp.bfloat16 if use_bf16_matmul else a_mat.dtype
    itemsize = jnp.dtype(mat_dtype).itemsize
    d_pad = _round_up(d, 128)

    tm, tn, n_pad, m_pad = _pick_tiles(n_a, n_b, d_pad, itemsize, tile_m, tile_n)
    grid = (n_pad // tm, m_pad // tn)
    row_ragged = n_pad != n_a
    col_ragged = m_pad != n_b

    # Inverse L2 norms (F.normalize eps=1e-12) computed once, in f32, outside
    # the kernel; padded rows get an inverse norm of 0.
    def inv_l2(x):
        ss = jnp.sum(jnp.square(x.astype(jnp.float32)), axis=1)
        return lax.rsqrt(jnp.maximum(ss, jnp.float32(1e-24)))

    a_inv = jnp.pad(inv_l2(a_mat), (0, n_pad - n_a)).reshape(n_pad, 1)
    b_inv = jnp.pad(inv_l2(b_mat), (0, m_pad - n_b)).reshape(1, m_pad)

    a = jnp.pad(a_mat.astype(mat_dtype), ((0, n_pad - n_a), (0, d_pad - d)))
    b = jnp.pad(b_mat.astype(mat_dtype), ((0, m_pad - n_b), (0, d_pad - d)))

    kernel = functools.partial(
        _sim_min_loss_kernel,
        n_rows_a=n_a, n_rows_b=n_b, tile_m=tm, tile_n=tn,
        row_ragged=row_ragged, col_ragged=col_ragged)

    # VMEM need: double-buffered operand blocks + [tm, tn] f32 temporaries.
    need = (2 * (tm + tn) * d_pad * itemsize
            + 3 * tm * _round_up(tn, 128) * 4
            + (1 << 20))
    vmem_limit = int(min(max(int(need * 1.5), 16 << 20), 32 << 20))

    # TODO(synk): for very large D (operand blocks over budget even at tn=128),
    # add a third "arbitrary" grid axis over D chunks with a VMEM [tm, tn] f32
    # accumulator to keep per-step VMEM bounded on v7x.
    partials = pl.pallas_call(
        kernel,
        out_shape=jax.ShapeDtypeStruct((grid[0], 1), jnp.float32),
        grid_spec=pltpu.PrefetchScalarGridSpec(
            num_scalar_prefetch=0,
            grid=grid,
            in_specs=[
                pl.BlockSpec((tm, d_pad), lambda i, j: (i, 0)),   # A row tile
                pl.BlockSpec((tn, d_pad), lambda i, j: (j, 0)),   # B row tile
                pl.BlockSpec((tm, 1), lambda i, j: (i, 0)),       # 1/||A row||
                pl.BlockSpec((1, tn), lambda i, j: (0, j)),       # 1/||B row||
            ],
            out_specs=pl.BlockSpec((1, 1), lambda i, j: (i, 0),
                                   memory_space=pltpu.SMEM),
            scratch_shapes=[pltpu.VMEM((1, tn), jnp.float32)],    # per-i partial row
        ),
        compiler_params=pltpu.CompilerParams(
            dimension_semantics=("parallel", "arbitrary"),
            vmem_limit_bytes=vmem_limit,
        ),
    )(a, b, a_inv, b_inv)

    return jnp.sum(partials) * (loss_weight / (n * m))


if __name__ == "__main__":
    key = jax.random.PRNGKey(0)
    k1, k2, k3, k4, k5, k6, k7, k8 = jax.random.split(key, 8)

    # Pure-JAX reference (same math as the PyTorch module).
    def ref(fg, bg, w=1.0):
        fg_n = fg / jnp.maximum(jnp.linalg.norm(fg, axis=1, keepdims=True), 1e-12)
        bg_n = bg / jnp.maximum(jnp.linalg.norm(bg, axis=1, keepdims=True), 1e-12)
        sim = jnp.clip(fg_n @ bg_n.T, 0.0005, 0.9995)
        return jnp.mean(-jnp.log(1.0 - sim)) * w

    def check(out, r, name):
        assert jnp.allclose(out, r, rtol=1e-4, atol=1e-5), (name, out, r)

    # Case 1: small [batch, feat] inputs, single tile, B fully resident.
    cls_score = jax.random.normal(k1, (8, 32), dtype=jnp.float32)
    label = jax.random.normal(k2, (8, 32), dtype=jnp.float32)
    out1 = sim_min_loss(cls_score, label, loss_weight=1.0)
    jax.block_until_ready(out1)
    check(out1, ref(cls_score, label, 1.0), "case1")

    # Case 2: ragged shapes -> padding + edge masking on both axes.
    fg2 = jax.random.normal(k3, (20, 40), dtype=jnp.float32)
    bg2 = jax.random.normal(k4, (12, 40), dtype=jnp.float32)
    out2 = sim_min_loss(fg2, bg2, loss_weight=0.5)
    jax.block_until_ready(out2)
    check(out2, ref(fg2, bg2, 0.5), "case2")

    # Case 3: forced small tiles -> full 2-D grid (parallel i, streamed j),
    # per-row-tile partial sums, edge-only masking on both grid axes.
    fg3 = jax.random.normal(k5, (160, 64), dtype=jnp.float32)
    bg3 = jax.random.normal(k6, (144, 64), dtype=jnp.float32)
    out3 = sim_min_loss(fg3, bg3, loss_weight=1.0, tile_m=64, tile_n=128)
    jax.block_until_ready(out3)
    check(out3, ref(fg3, bg3, 1.0), "case3")

    # Case 4: label has more rows than cls_score -> operands swapped internally.
    fg4 = jax.random.normal(k7, (16, 48), dtype=jnp.float32)
    bg4 = jax.random.normal(k8, (48, 48), dtype=jnp.float32)
    out4 = sim_min_loss(fg4, bg4, loss_weight=2.0)
    jax.block_until_ready(out4)
    check(out4, ref(fg4, bg4, 2.0), "case4")

    print("KERNEL_OK")
</pallas_src>

<mosaic_0001>
module attributes {stable_mosaic.version = 11 : i64} {
  func.func @_sim_min_loss_kernel(%arg0: i32, %arg1: i32, %arg2: memref<8x128xf32, #tpu.memory_space<vmem>>, %arg3: memref<8x128xf32, #tpu.memory_space<vmem>>, %arg4: memref<8x1xf32, #tpu.memory_space<vmem>>, %arg5: memref<1x8xf32, #tpu.memory_space<vmem>>, %arg6: memref<1x1xf32, #tpu.memory_space<smem>>, %arg7: memref<1x8xf32, #tpu.memory_space<vmem>>) attributes {dimension_semantics = [#tpu.dimension_semantics<parallel>, #tpu.dimension_semantics<arbitrary>], iteration_bounds = array<i64: 1, 1>, scalar_prefetch = 0 : i64, scratch_operands = 1 : i64, tpu.core_type = #tpu.core_type<tc>, window_params = [{transform_indices = @transform_0, window_bounds = array<i64: 8, 128>}, {transform_indices = @transform_1, window_bounds = array<i64: 8, 128>}, {transform_indices = @transform_2, window_bounds = array<i64: 8, 1>}, {transform_indices = @transform_3, window_bounds = array<i64: 1, 8>}, {transform_indices = @transform_4, window_bounds = array<i64: 1, 1>}]} {
    %c0_i32 = arith.constant 0 : i32
    %0 = arith.cmpi eq, %arg1, %c0_i32 : i32
    %1 = arith.extui %0 : i1 to i32
    %c0_i32_0 = arith.constant 0 : i32
    %2 = arith.cmpi ne, %1, %c0_i32_0 : i32
    scf.if %2 {
      %cst_19 = arith.constant 0.000000e+00 : f32
      %29 = vector.broadcast %cst_19 : f32 to vector<1x8xf32>
      %c0_20 = arith.constant 0 : index
      %c0_21 = arith.constant 0 : index
      %30 = vector.load %arg7[%c0_20, %c0_21] : memref<1x8xf32, #tpu.memory_space<vmem>>, vector<1x8xf32>
      tpu.vector_store %arg7[%c0_20, %c0_21], %29 {strides = array<i32>} : memref<1x8xf32, #tpu.memory_space<vmem>>, vector<1x8xf32>,
    } else {
    }
    %c0 = arith.constant 0 : index
    %c0_1 = arith.constant 0 : index
    %3 = vector.load %arg2[%c0, %c0_1] : memref<8x128xf32, #tpu.memory_space<vmem>>, vector<8x128xf32>
    %c0_2 = arith.constant 0 : index
    %c0_3 = arith.constant 0 : index
    %4 = vector.load %arg3[%c0_2, %c0_3] : memref<8x128xf32, #tpu.memory_space<vmem>>, vector<8x128xf32>
    %cst = arith.constant dense<0.000000e+00> : vector<8x8xf32>
    %5 = tpu.matmul %3, %4, %cst {dimension_numbers = #tpu.dot_dimension_numbers<[1], [1], [0], [0], [0, 0, 1, 0], [], []>} : vector<8x128xf32>, vector<8x128xf32>, vector<8x8xf32> -> vector<8x8xf32>
    %c0_4 = arith.constant 0 : index
    %c0_5 = arith.constant 0 : index
    %6 = vector.load %arg4[%c0_4, %c0_5] : memref<8x1xf32, #tpu.memory_space<vmem>>, vector<8x1xf32>
    %7 = vector.broadcast %6 : vector<8x1xf32> to vector<8x8xf32>
    %8 = arith.mulf %5, %7 : vector<8x8xf32>
    %c0_6 = arith.constant 0 : index
    %c0_7 = arith.constant 0 : index
    %9 = vector.load %arg5[%c0_6, %c0_7] : memref<1x8xf32, #tpu.memory_space<vmem>>, vector<1x8xf32>
    %10 = vector.broadcast %9 : vector<1x8xf32> to vector<8x8xf32>
    %11 = arith.mulf %8, %10 : vector<8x8xf32>
    %cst_8 = arith.constant 5.000000e-04 : f32
    %cst_9 = arith.constant 0.999499976 : f32
    %12 = vector.broadcast %cst_8 : f32 to vector<8x8xf32>
    %13 = arith.maximumf %12, %11 : vector<8x8xf32>
    %14 = vector.broadcast %cst_9 : f32 to vector<8x8xf32>
    %15 = arith.minimumf %14, %13 : vector<8x8xf32>
    %cst_10 = arith.constant 1.000000e+00 : f32
    %16 = vector.broadcast %cst_10 : f32 to vector<8x8xf32>
    %17 = arith.subf %16, %15 : vector<8x8xf32>
    %18 = math.log %17 : vector<8x8xf32>
    %cst_11 = arith.constant 0.000000e+00 : f32
    %19 = vector.broadcast %cst_11 : f32 to vector<8x8xf32>
    %20 = arith.subf %19, %18 : vector<8x8xf32>
    %c0_12 = arith.constant 0 : index
    %c0_13 = arith.constant 0 : index
    %21 = vector.load %arg7[%c0_12, %c0_13] : memref<1x8xf32, #tpu.memory_space<vmem>>, vector<1x8xf32>
    %cst_14 = arith.constant dense<0.000000e+00> : vector<8xf32>
    %22 = vector.multi_reduction <add>, %20, %cst_14 [0] : vector<8x8xf32> to vector<8xf32>
    %23 = vector.shape_cast %22 : vector<8xf32> to vector<1x8xf32>
    %24 = arith.addf %21, %23 : vector<1x8xf32>
    %c0_15 = arith.constant 0 : index
    %c0_16 = arith.constant 0 : index
    %25 = vector.load %arg7[%c0_15, %c0_16] : memref<1x8xf32, #tpu.memory_space<vmem>>, vector<1x8xf32>
    tpu.vector_store %arg7[%c0_15, %c0_16], %24 {strides = array<i32>} : memref<1x8xf32, #tpu.memory_space<vmem>>, vector<1x8xf32>,
    %c0_i32_17 = arith.constant 0 : i32
    %26 = arith.cmpi eq, %arg1, %c0_i32_17 : i32
    %27 = arith.extui %26 : i1 to i32
    %c0_i32_18 = arith.constant 0 : i32
    %28 = arith.cmpi ne, %27, %c0_i32_18 : i32
    scf.if %28 {
      %c0_19 = arith.constant 0 : index
      %c0_20 = arith.constant 0 : index
      %29 = vector.load %arg7[%c0_19, %c0_20] : memref<1x8xf32, #tpu.memory_space<vmem>>, vector<1x8xf32>
      %30 = vector.shape_cast %29 : vector<1x8xf32> to vector<1x1x8xf32>
      %cst_21 = arith.constant dense<0.000000e+00> : vector<1xf32>
      %31 = vector.multi_reduction <add>, %30, %cst_21 [1, 2] : vector<1x1x8xf32> to vector<1xf32>
      %32 = vector.shape_cast %31 : vector<1xf32> to vector<1x1x1xf32>
      %33 = vector.extract %32[0, 0, 0] : f32 from vector<1x1x1xf32>
      %c0_22 = arith.constant 0 : index
      %c0_23 = arith.constant 0 : index
      %34 = memref.load %arg6[%c0_22, %c0_23] : memref<1x1xf32, #tpu.memory_space<smem>>
      memref.store %33, %arg6[%c0_22, %c0_23] : memref<1x1xf32, #tpu.memory_space<smem>>
    } else {
    }
    return
  }
  func.func @transform_0(%arg0: i32, %arg1: i32) -> (i32, i32) {
    %c0_i32 = arith.constant 0 : i32
    %c0_i32_0 = arith.constant 0 : i32
    return %arg0, %c0_i32 : i32, i32
  }
  func.func @transform_1(%arg0: i32, %arg1: i32) -> (i32, i32) {
    %c0_i32 = arith.constant 0 : i32
    %c0_i32_0 = arith.constant 0 : i32
    return %arg1, %c0_i32 : i32, i32
  }
  func.func @transform_2(%arg0: i32, %arg1: i32) -> (i32, i32) {
    %c0_i32 = arith.constant 0 : i32
    %c0_i32_0 = arith.constant 0 : i32
    return %arg0, %c0_i32 : i32, i32
  }
  func.func @transform_3(%arg0: i32, %arg1: i32) -> (i32, i32) {
    %c0_i32 = arith.constant 0 : i32
    %c0_i32_0 = arith.constant 0 : i32
    return %c0_i32, %arg1 : i32, i32
  }
  func.func @transform_4(%arg0: i32, %arg1: i32) -> (i32, i32) {
    %c0_i32 = arith.constant 0 : i32
    %c0_i32_0 = arith.constant 0 : i32
    return %arg0, %c0_i32 : i32, i32
  }
}

</mosaic_0001>

<llo_original>
// kernel: tpu_custom_call.1
$region0: #{tpu_custom_call.1}
  #allocation0 [shape = 'u32[]', space=smem, size = 0x4, offset = 0x4, fixed_abs, tag = 'smem constant byte address 0x4 - core index']
  #allocation1 [shape = 'u32[144,128]{1,0:T(1,128)}', space=vmem, size = 0x12000, scoped, tag = 'internal scratch']
  #allocation2 [shape = 'f32[1,8]{1,0:T(1,128)}', space=vmem, size = 0x200, scoped, tag = 'scratch operand']
  %s0 = inlined_call_operand.vmem [shape: f32[8,128], index: 0, kind: input, shape index: {}]
  %s1 = inlined_call_operand.hbm [shape: f32[8,128], index: 1, kind: input, shape index: {}]
  %s2 = inlined_call_operand.vmem [shape: f32[8,1], index: 2, kind: input, shape index: {}]
  %s3 = inlined_call_operand.vmem [shape: f32[1,8], index: 3, kind: input, shape index: {}]
  %s4 = inlined_call_operand.hbm [shape: f32[1,1], index: 4, kind: output, shape index: {}]
  %s5 = sld [smem:[#allocation0]]
  $region38: #{tpu_custom_call.1} parent=0
    _
  %s7 = ssub.s32 1, %s5
  %s8 = scalar_select 0, %s7, %s5
  $region1: #{tpu_custom_call.1} parent=0
    #allocation3 [shape = 'u8[4096]{0}', space=vmem, size = 0x1000, scoped, tag = 'input window, operand 1, single buffered']
    #allocation4 [shape = 's32[1]{0}', space=sflag, size = 0x4, scoped, tag = 'scoped memory for tpu_custom_call.1']
    #allocation5 [shape = 's32[1]{0}', space=sflag, size = 0x4, scoped, tag = 'scoped memory for tpu_custom_call.1']
    #allocation6 [shape = 'u8[512]{0}', space=smem, size = 0x200, scoped, tag = 'output window, operand 0, single buffered']
    %9 = vsyncpa [#allocation4], 0
    %10 = vsyncpa [#allocation5], 0
    // Predicated region
    $region2: #{tpu_custom_call.1} parent=1 // pred_check
      _
    $region3: #{tpu_custom_call.1} parent=1 // pred_check_branch
      %12 = sbr.rel (0) target = $region5
    $region4: #{tpu_custom_call.1} parent=1 // pred_region
      _
    $region5: #{tpu_custom_call.1} parent=1 // pred_fallthru
      _
    // Predicated region
    $region6: #{tpu_custom_call.1} parent=1 // pred_check
      _
    $region7: #{tpu_custom_call.1} parent=1 // pred_check_branch
      %14 = sbr.rel (0) target = $region9
    $region8: #{tpu_custom_call.1} parent=1 // pred_region
      %s16 = ssub.s32 128, 128
      %17 = vsyncadd [#allocation4], %s16
      %s19 = sshll.u32 [#allocation3], 4
      %s20 = int_to_ptr.vmem [resolvable:$true] %s19
      %22 = dma.hbm_to_vmem [thread:$0]  %s1, 128, %s20, [#allocation4]
    $region9: #{tpu_custom_call.1} parent=1 // pred_fallthru
      _
    // Predicated region
    $region10: #{tpu_custom_call.1} parent=1 // pred_check
      _
    $region11: #{tpu_custom_call.1} parent=1 // pred_check_branch
      %24 = sbr.rel (0) target = $region13
    $region12: #{tpu_custom_call.1} parent=1 // pred_region
      _
    $region13: #{tpu_custom_call.1} parent=1 // pred_fallthru
      _
    // Predicated region
    $region14: #{tpu_custom_call.1} parent=1 // pred_check
      _
    $region15: #{tpu_custom_call.1} parent=1 // pred_check_branch
      %26 = sbr.rel (0) target = $region17
    $region16: #{tpu_custom_call.1} parent=1 // pred_region
      _
    $region17: #{tpu_custom_call.1} parent=1 // pred_fallthru
      _
    // Predicated region
    $region18: #{tpu_custom_call.1} parent=1 // pred_check
      _
    $region19: #{tpu_custom_call.1} parent=1 // pred_check_branch
      %28 = sbr.rel (0) target = $region21
    $region20: #{tpu_custom_call.1} parent=1 // pred_region
      %29 = dma.done [#allocation4], 128
    $region21: #{tpu_custom_call.1} parent=1 // pred_fallthru
      _
    %p30 = scmp.eq.s32.totalorder 0, 0
    // Predicated region
    $region22: #{tpu_custom_call.1} parent=1 // pred_check
      %p31 = pneg %p30
    $region23: #{tpu_custom_call.1} parent=1 // pred_check_branch
      %33 = sbr.rel (%p31) target = $region25
    $region24: #{tpu_custom_call.1} parent=1 // pred_region
      %vm34 = vcmask 57344
      %35 = vst.msk [vmem:[#allocation2] sm:$0x1] %vm34, 0.0
    $region25: #{tpu_custom_call.1} parent=1 // pred_fallthru
      _
    %v36 = vld [vmem:[%s0] sm:$0xff]
    %v37 = vld [vmem:[#allocation3] sm:$0xff]
    %38 = vmatprep.subr.mxu0 0.0
    %39 = vmatpush1.xpose.msra.mxu0 %v37
    %40 = vmatprep.subr.mxu0 0.0
    %41 = vmatpush1.xpose.msra.mxu0 0.0
    %42 = vmatprep.subr.mxu0 0.0
    %43 = vmatpush1.xpose.msra.mxu0 0.0
    %44 = vmatprep.subr.mxu0 0.0
    %45 = vmatpush1.xpose.msra.mxu0 0.0
    %46 = vmatprep.subr.mxu0 0.0
    %47 = vmatpush1.xpose.msra.mxu0 0.0
    %48 = vmatprep.subr.mxu0 0.0
    %49 = vmatpush1.xpose.msra.mxu0 0.0
    %50 = vmatprep.subr.mxu0 0.0
    %51 = vmatpush1.xpose.msra.mxu0 0.0
    %52 = vmatprep.subr.mxu0 0.0
    %53 = vmatpush1.xpose.msra.mxu0 0.0
    %54 = vmatprep.subr.mxu0 0.0
    %55 = vmatpush1.xpose.msra.mxu0 0.0
    %56 = vmatprep.subr.mxu0 0.0
    %57 = vmatpush1.xpose.msra.mxu0 0.0
    %58 = vmatprep.subr.mxu0 0.0
    %59 = vmatpush1.xpose.msra.mxu0 0.0
    %60 = vmatprep.subr.mxu0 0.0
    %61 = vmatpush1.xpose.msra.mxu0 0.0
    %62 = vmatprep.subr.mxu0 0.0
    %63 = vmatpush1.xpose.msra.mxu0 0.0
    %64 = vmatprep.subr.mxu0 0.0
    %65 = vmatpush1.xpose.msra.mxu0 0.0
    %66 = vmatprep.subr.mxu0 0.0
    %67 = vmatpush1.xpose.msra.mxu0 0.0
    %68 = vmatprep.subr.mxu0 0.0
    %69 = vmatpush1.xpose.msra.mxu0 0.0
    %70 = vmatprep.subr.mxu0 0.0
    %71 = vmatpush1.xpose.msra.mxu0 0.0
    %72 = vmatprep.subr.mxu0 0.0
    %73 = vmatpush1.xpose.msra.mxu0 0.0
    %74 = vmatprep.subr.mxu0 0.0
    %75 = vmatpush1.xpose.msra.mxu0 0.0
    %76 = vmatprep.subr.mxu0 0.0
    %77 = vmatpush1.xpose.msra.mxu0 0.0
    %78 = vmatprep.subr.mxu0 0.0
    %79 = vmatpush1.xpose.msra.mxu0 0.0
    %80 = vmatprep.subr.mxu0 0.0
    %81 = vmatpush1.xpose.msra.mxu0 0.0
    %82 = vmatprep.subr.mxu0 0.0
    %83 = vmatpush1.xpose.msra.mxu0 0.0
    %84 = vmatprep.subr.mxu0 0.0
    %85 = vmatpush1.xpose.msra.mxu0 0.0
    %86 = vmatprep.subr.mxu0 0.0
    %87 = vmatpush1.xpose.msra.mxu0 0.0
    %88 = vmatprep.subr.mxu0 0.0
    %89 = vmatpush1.xpose.msra.mxu0 0.0
    %90 = vmatprep.subr.mxu0 0.0
    %91 = vmatpush1.xpose.msra.mxu0 0.0
    %92 = vmatprep.subr.mxu0 0.0
    %93 = vmatpush1.xpose.msra.mxu0 0.0
    %94 = vmatprep.subr.mxu0 0.0
    %95 = vmatpush1.xpose.msra.mxu0 0.0
    %96 = vmatprep.subr.mxu0 0.0
    %97 = vmatpush1.xpose.msra.mxu0 0.0
    %98 = vmatprep.subr.mxu0 0.0
    %99 = vmatpush1.xpose.msra.mxu0 0.0
    %100 = vmatprep.subr.mxu0 0.0
    %101 = vmatpush1.xpose.msra.mxu0 0.0
    %102 = vmatprep.mubr.f32.mxu0 0.0
    %103 = vmatmul.mubr.f32.gmra.mrb[0].mxu0 %v36
    %v104 = vpop.f32.mrb[0].mxu0
    %v105 = vadd.f32 0.0, %v104
    %v106 = vpop.f32.mrb[0].mxu0
    %107 = vdwg.mxu0
    %v108 = vld [vmem:[%s2] sm:$0xff]
    %110 = vset.pattern.permute.xlu0 0
    %111 = vperm.xlu0 %110, %v108
    %v112 = vpop.permute.xlu0 %111
    %v114 = vmul.f32 %v105, %v112
    %v115 = vld [vmem:[%s3] sm:$0x1]
    %v117 = vlaneseq
    %v118 = vshrl.u32 %v117, 7
    %v119 = vsub.s32 0, %v118
    %v120 = vrot.slane %v115, %v119
    %v122 = vmul.f32 %v114, %v120
    %v123 = vmax.f32 %v122, 0.0005
    %v124 = vmin.f32 %v123, 0.9995
    %v125 = vsub.f32 1.0, %v124
    %v126 = vlog2.pop %v125
    %v127 = vmul.f32 %v126, 0.6931472
    %v128 = vsub.f32 0.0, %v127
    %v129 = vld [vmem:[#allocation2] sm:$0x1]
    %vm130 = vcmask 64512
    %v131 = vsel %vm130, %v128, 0.0
    %v132 = vrot.slane %v131, 4
    %v133 = vadd.f32 %v131, %v132
    %v134 = vrot.slane %v133, 2
    %v135 = vadd.f32 %v133, %v134
    %v136 = vrot.slane %v135, 1
    %v137 = vadd.f32 %v135, %v136
    %v138 = vadd.f32 %v129, %v137
    %vm139 = vcmask 57344
    %140 = vst.msk [vmem:[#allocation2] sm:$0x1] %vm139, %v138
    // Predicated region
    $region26: #{tpu_custom_call.1} parent=1 // pred_check
      %p141 = pneg %p30
    $region27: #{tpu_custom_call.1} parent=1 // pred_check_branch
      %143 = sbr.rel (%p141) target = $region29
    $region28: #{tpu_custom_call.1} parent=1 // pred_region
      %v144 = vld [vmem:[#allocation2] sm:$0x1]
      %v145 = vsel %vm139, %v144, 0.0
      %146 = vadd.xlane.f32.xlu0 %v145
      %v147 = vpop.xlane.xlu0 %146
      %v148 = vrot.slane %v147, 4
      %v149 = vadd.f32 %v147, %v148
      %v150 = vrot.slane %v149, 2
      %v151 = vadd.f32 %v149, %v150
      %v152 = vrot.slane %v151, 1
      %v153 = vadd.f32 %v151, %v152
      %s154 = vtos %v153
      %s155 = scalar_lea.smem [#allocation6], 0
      %156 = sst [smem:[%s155]] %s154
    $region29: #{tpu_custom_call.1} parent=1 // pred_fallthru
      _
    // Predicated region
    $region30: #{tpu_custom_call.1} parent=1 // pred_check
      _
    $region31: #{tpu_custom_call.1} parent=1 // pred_check_branch
      %158 = sbr.rel (0) target = $region33
    $region32: #{tpu_custom_call.1} parent=1 // pred_region
      %s160 = ssub.s32 16, 16
      %161 = vsyncadd [#allocation5], %s160
      %164 = dma.smem_to_hbm [#allocation6], 16, %s4, [#allocation5]
    $region33: #{tpu_custom_call.1} parent=1 // pred_fallthru
      _
    // Predicated region
    $region34: #{tpu_custom_call.1} parent=1 // pred_check
      _
    $region35: #{tpu_custom_call.1} parent=1 // pred_check_branch
      %166 = sbr.rel (0) target = $region37
    $region36: #{tpu_custom_call.1} parent=1 // pred_region
      %167 = dma.done [#allocation5], 16
    $region37: #{tpu_custom_call.1} parent=1 // pred_fallthru
      _
    %168 = sfence
    %169 = vsyncpa [#allocation4], 1
    %170 = vsyncpa [#allocation5], 1

</llo_original>
